<compile_context>
chip_gen: v7x
topology: tpu7x:2x2x1
jax: 0.10.0
libtpu: 0.0.40
codegen_flags: <defaults>
</compile_context>

<pallas_src>
import functools

import jax
import jax.numpy as jnp
from jax import lax
from jax.experimental import pallas as pl
from jax.experimental.pallas import tpu as pltpu

TAU = 0.05
ALPHA = 0.5          # ab_weight
LARGE_NUM = 1.0e9


def _icl_tile_kernel(zis_ref, zjs_ref, out_ref, *, tq, b_valid):
    """Partial sums of loss_a / loss_b for query rows [i*tq, (i+1)*tq)."""
    i = pl.program_id(0)
    B = zis_ref.shape[0]                    # padded batch (key count)
    inv_tau = jnp.float32(1.0 / TAU)

    # Keys: full pre-normalized bf16 blocks, VMEM-resident across the grid.
    k_is = zis_ref[...]                     # (B, D)
    k_js = zjs_ref[...]

    # Query tile: plain dynamic slice of the resident block (no re-normalize).
    row0 = pl.multiple_of(i * tq, tq)
    q_is = zis_ref[pl.ds(row0, tq), :]      # (tq, D)
    q_js = zjs_ref[pl.ds(row0, tq), :]

    # A . B^T directly on the MXU: contract LAST dims, accumulate in f32.
    dn = (((1,), (1,)), ((), ()))
    logits_ab = lax.dot_general(q_is, k_js, dn,
                                preferred_element_type=jnp.float32) * inv_tau
    logits_aa = lax.dot_general(q_is, k_is, dn,
                                preferred_element_type=jnp.float32) * inv_tau
    logits_ba = lax.dot_general(q_js, k_is, dn,
                                preferred_element_type=jnp.float32) * inv_tau
    logits_bb = lax.dot_general(q_js, k_js, dn,
                                preferred_element_type=jnp.float32) * inv_tau

    # Mask self-similarity diagonal of aa/bb and (if the batch was padded) the
    # padded key columns of all four blocks.  b_valid and B are static ints.
    row = lax.broadcasted_iota(jnp.int32, (tq, B), 0) + i * tq
    col = lax.broadcasted_iota(jnp.int32, (tq, B), 1)
    diag = row == col
    if b_valid < B:
        pad_col = col >= b_valid
        neg_self = jnp.where(diag | pad_col, jnp.float32(LARGE_NUM), jnp.float32(0.0))
        neg_pad = jnp.where(pad_col, jnp.float32(LARGE_NUM), jnp.float32(0.0))
        logits_ab = logits_ab - neg_pad
        logits_ba = logits_ba - neg_pad
    else:
        neg_self = jnp.where(diag, jnp.float32(LARGE_NUM), jnp.float32(0.0))
    logits_aa = logits_aa - neg_self
    logits_bb = logits_bb - neg_self

    # Positive logit = zis_i . zjs_i / tau (identical for both directions);
    # O(tq*D) row dot instead of a diagonal select over a (tq, B) block.
    pos = jnp.sum(q_is.astype(jnp.float32) * q_js.astype(jnp.float32),
                  axis=1, keepdims=True) * inv_tau               # (tq, 1)

    # Bounded-logit logsumexp: unit-norm inputs => every unmasked logit is
    # <= 1/tau (tiny bf16 slack is harmless for exp), so a constant max avoids
    # four (tq, B) cross-lane max reductions per step.  Only valid for norm=True.
    m = jnp.float32(1.0 / TAU)

    def lse(blk0, blk1):                     # logsumexp over [blk0 | blk1]
        s = (jnp.sum(jnp.exp(blk0 - m), axis=1, keepdims=True)
             + jnp.sum(jnp.exp(blk1 - m), axis=1, keepdims=True))
        return m + jnp.log(s)                # (tq, 1)

    loss_a_rows = lse(logits_ab, logits_aa) - pos
    loss_b_rows = lse(logits_ba, logits_bb) - pos

    if b_valid < B:                          # drop padded query rows
        rvalid = (lax.broadcasted_iota(jnp.int32, (tq, 1), 0) + i * tq) < b_valid
        w = jnp.where(rvalid, jnp.float32(1.0), jnp.float32(0.0))
        loss_a_rows = loss_a_rows * w
        loss_b_rows = loss_b_rows * w

    out_ref[0, 0] = jnp.sum(loss_a_rows)
    out_ref[0, 1] = jnp.sum(loss_b_rows)


def _round_up(x, m):
    return (x + m - 1) // m * m


def _tpu_vmem_capacity():
    try:
        info = pltpu.get_tpu_info()
        cap = getattr(info, "vmem_capacity_bytes", None)
        if cap:
            return int(cap)
    except Exception:
        pass
    return 128 * 2**20


def _budgets():
    """(per-step live-logits budget, vmem_limit cap) sized per generation."""
    cap = _tpu_vmem_capacity()
    if cap <= 64 * 2**20:                    # v7x-class: 64 MiB physical per TC
        return 16 * 2**20, 52 * 2**20
    return 32 * 2**20, 96 * 2**20            # v5e / v6e: 128 MiB physical


def _pick_tiling(B, logits_budget):
    """Query-tile size tq (multiple of 16 for bf16 sublane packing) and padded
    batch B_pad (multiple of tq), keeping ~8*tq*B_pad*4 bytes of live logits
    within the budget."""
    b16 = _round_up(B, 16)
    for tq in (512, 256, 128, 64, 32, 16):
        if tq > b16:
            continue
        b_pad = _round_up(B, tq)
        if 8 * tq * b_pad * 4 <= logits_budget:
            return tq, b_pad
    return 16, b16


def _vmem_limit_bytes(B_pad, D_pad, tq, vmem_cap):
    keys = 2 * B_pad * D_pad * 2             # two bf16 resident key blocks
    logits = 8 * tq * B_pad * 4              # 4 f32 logit blocks + exp temporaries
    misc = 4 * tq * D_pad * 4 + (1 << 20)
    est = keys + logits + misc
    return int(min(max(2 * est, 32 * 2**20), vmem_cap))


def icl_loss_pallas(emb, train_links, tq=None):
    """emb: (num_ent, D) float32; train_links: (B, 2) int indices into emb."""
    # TODO(synk): the gather could be fused into the kernel via scalar-prefetched
    # train_links + manual DMA from emb (memory_space=pl.ANY); kept in JAX since
    # the full zis/zjs must be VMEM-resident as key sets anyway.
    zis = emb[train_links[:, 0]].astype(jnp.float32)
    zjs = emb[train_links[:, 1]].astype(jnp.float32)
    B, D = zis.shape

    # One-time work stays in the wrapper (megacore-safe, never repeated per tile).
    # F.normalize(dim=1, eps=1e-12): x * rsqrt(max(||x||^2, eps^2)).
    def normalize(x):
        ss = jnp.sum(x * x, axis=1, keepdims=True)
        return x * lax.rsqrt(jnp.maximum(ss, jnp.float32(1e-24)))

    zis = normalize(zis)
    zjs = normalize(zjs)

    logits_budget, vmem_cap = _budgets()
    if tq is None:
        tq, B_pad = _pick_tiling(B, logits_budget)
    else:
        B_pad = _round_up(B, tq)
    D_pad = _round_up(D, 128)

    # Zero-pad to layout/MXU-friendly shapes (norm- and dot-neutral) and feed
    # the MXU bf16 operands (full-rate path; halves resident VMEM + DMA bytes).
    pad = ((0, B_pad - B), (0, D_pad - D))
    zis_p = jnp.pad(zis, pad).astype(jnp.bfloat16)
    zjs_p = jnp.pad(zjs, pad).astype(jnp.bfloat16)

    num_tiles = B_pad // tq
    kernel = functools.partial(_icl_tile_kernel, tq=tq, b_valid=B)
    out_shape = jax.ShapeDtypeStruct((num_tiles, 2), jnp.float32)
    out_spec = pl.BlockSpec((1, 2), lambda i: (i, 0),
                            memory_space=pltpu.MemorySpace.SMEM)
    cparams = pltpu.CompilerParams(
        dimension_semantics=("parallel",),
        vmem_limit_bytes=_vmem_limit_bytes(B_pad, D_pad, tq, vmem_cap),
    )

    def run(in_specs):
        return pl.pallas_call(
            kernel,
            out_shape=out_shape,
            grid=(num_tiles,),
            in_specs=in_specs,
            out_specs=out_spec,
            compiler_params=cparams,
        )(zis_p, zjs_p)

    # Preferred: whole-array VMEM residency (copied in once, no per-step DMA and
    # no double-buffering of a grid-invariant block).  Fallback: the previously
    # validated blocked constant-index spec (semantically identical).
    resident_specs = [pl.BlockSpec(memory_space=pltpu.MemorySpace.VMEM),
                      pl.BlockSpec(memory_space=pltpu.MemorySpace.VMEM)]
    blocked_specs = [pl.BlockSpec((B_pad, D_pad), lambda i: (0, 0)),
                     pl.BlockSpec((B_pad, D_pad), lambda i: (0, 0))]
    try:
        partials = run(resident_specs)
    except Exception:
        partials = run(blocked_specs)

    loss_a = jnp.sum(partials[:, 0]) / jnp.float32(B)
    loss_b = jnp.sum(partials[:, 1]) / jnp.float32(B)
    return jnp.float32(ALPHA) * loss_a + jnp.float32(1.0 - ALPHA) * loss_b


def icl_loss_reference(emb, train_links):
    """Pure-JAX mirror of the PyTorch forward (norm=True, neg_l=None, replay=False)."""
    emb = emb / jnp.maximum(jnp.linalg.norm(emb, axis=1, keepdims=True), 1e-12)
    zis = emb[train_links[:, 0]]
    zjs = emb[train_links[:, 1]]
    B = zis.shape[0]
    masks = jnp.eye(B, dtype=jnp.float32)
    logits_aa = zis @ zis.T / TAU - masks * LARGE_NUM
    logits_bb = zjs @ zjs.T / TAU - masks * LARGE_NUM
    logits_ab = zis @ zjs.T / TAU
    logits_ba = zjs @ zis.T / TAU
    logits_a = jnp.concatenate([logits_ab, logits_aa], axis=1)
    logits_b = jnp.concatenate([logits_ba, logits_bb], axis=1)
    labels = jax.nn.one_hot(jnp.arange(B), 2 * B, dtype=jnp.float32)

    def soft_xent(target, logits):
        logprobs = jax.nn.log_softmax(logits, axis=1)
        return -(target * logprobs).sum() / logits.shape[0]

    return ALPHA * soft_xent(labels, logits_a) + (1.0 - ALPHA) * soft_xent(labels, logits_b)


if __name__ == "__main__":
    key = jax.random.PRNGKey(0)
    num_ent, D, B = 16, 32, 8
    emb = jax.random.normal(key, (num_ent, D), dtype=jnp.float32)
    # Deterministic alignment links: left entities 0..7 paired with right entities 8..15.
    train_links = jnp.stack([jnp.arange(B, dtype=jnp.int32),
                             jnp.arange(B, dtype=jnp.int32) + B], axis=1)

    loss = icl_loss_pallas(emb, train_links)
    jax.block_until_ready(loss)

    loss_ref = icl_loss_reference(emb, train_links)
    # bf16 MXU operands => loosened tolerance vs. the f32 reference
    # (logit error ~ bf16 cosine error scaled by 1/tau = 20).
    assert jnp.allclose(loss, loss_ref, rtol=5e-2, atol=5e-2), (loss, loss_ref)

    print("KERNEL_OK")
</pallas_src>

<mosaic_0001>
module attributes {stable_mosaic.version = 11 : i64} {
  func.func @_icl_tile_kernel(%arg0: i32, %arg1: memref<16x128xbf16, #tpu.memory_space<vmem>>, %arg2: memref<16x128xbf16, #tpu.memory_space<vmem>>, %arg3: memref<1x2xf32, #tpu.memory_space<smem>>) attributes {dimension_semantics = [#tpu.dimension_semantics<parallel>], iteration_bounds = array<i64: 1>, scalar_prefetch = 0 : i64, scratch_operands = 0 : i64, tpu.core_type = #tpu.core_type<tc>, window_params = [{pipeline_mode = #tpu.pipeline_mode<synchronous>, transform_indices = @transform_0, window_bounds = array<i64: 16, 128>}, {pipeline_mode = #tpu.pipeline_mode<synchronous>, transform_indices = @transform_1, window_bounds = array<i64: 16, 128>}, {transform_indices = @transform_2, window_bounds = array<i64: 1, 2>}]} {
    %c0 = arith.constant 0 : index
    %c0_0 = arith.constant 0 : index
    %0 = vector.load %arg1[%c0, %c0_0] : memref<16x128xbf16, #tpu.memory_space<vmem>>, vector<16x128xbf16>
    %c0_1 = arith.constant 0 : index
    %c0_2 = arith.constant 0 : index
    %1 = vector.load %arg2[%c0_1, %c0_2] : memref<16x128xbf16, #tpu.memory_space<vmem>>, vector<16x128xbf16>
    %c16_i32 = arith.constant 16 : i32
    %2 = arith.muli %arg0, %c16_i32 : i32
    %3 = tpu.assume_multiple %2, 16 : i32
    %4 = arith.index_cast %3 : i32 to index
    %c0_3 = arith.constant 0 : index
    %5 = vector.load %arg1[%4, %c0_3] : memref<16x128xbf16, #tpu.memory_space<vmem>>, vector<16x128xbf16>
    %6 = arith.index_cast %3 : i32 to index
    %c0_4 = arith.constant 0 : index
    %7 = vector.load %arg2[%6, %c0_4] : memref<16x128xbf16, #tpu.memory_space<vmem>>, vector<16x128xbf16>
    %cst = arith.constant dense<0.000000e+00> : vector<16x16xf32>
    %8 = tpu.matmul %5, %1, %cst {dimension_numbers = #tpu.dot_dimension_numbers<[1], [1], [0], [0], [0, 0, 1, 0], [], []>} : vector<16x128xbf16>, vector<16x128xbf16>, vector<16x16xf32> -> vector<16x16xf32>
    %cst_5 = arith.constant 2.000000e+01 : f32
    %9 = vector.broadcast %cst_5 : f32 to vector<16x16xf32>
    %10 = arith.mulf %8, %9 : vector<16x16xf32>
    %cst_6 = arith.constant dense<0.000000e+00> : vector<16x16xf32>
    %11 = tpu.matmul %5, %0, %cst_6 {dimension_numbers = #tpu.dot_dimension_numbers<[1], [1], [0], [0], [0, 0, 1, 0], [], []>} : vector<16x128xbf16>, vector<16x128xbf16>, vector<16x16xf32> -> vector<16x16xf32>
    %cst_7 = arith.constant 2.000000e+01 : f32
    %12 = vector.broadcast %cst_7 : f32 to vector<16x16xf32>
    %13 = arith.mulf %11, %12 : vector<16x16xf32>
    %cst_8 = arith.constant dense<0.000000e+00> : vector<16x16xf32>
    %14 = tpu.matmul %7, %0, %cst_8 {dimension_numbers = #tpu.dot_dimension_numbers<[1], [1], [0], [0], [0, 0, 1, 0], [], []>} : vector<16x128xbf16>, vector<16x128xbf16>, vector<16x16xf32> -> vector<16x16xf32>
    %cst_9 = arith.constant 2.000000e+01 : f32
    %15 = vector.broadcast %cst_9 : f32 to vector<16x16xf32>
    %16 = arith.mulf %14, %15 : vector<16x16xf32>
    %cst_10 = arith.constant dense<0.000000e+00> : vector<16x16xf32>
    %17 = tpu.matmul %7, %1, %cst_10 {dimension_numbers = #tpu.dot_dimension_numbers<[1], [1], [0], [0], [0, 0, 1, 0], [], []>} : vector<16x128xbf16>, vector<16x128xbf16>, vector<16x16xf32> -> vector<16x16xf32>
    %cst_11 = arith.constant 2.000000e+01 : f32
    %18 = vector.broadcast %cst_11 : f32 to vector<16x16xf32>
    %19 = arith.mulf %17, %18 : vector<16x16xf32>
    %20 = tpu.iota {dimensions = array<i32: 0>} : vector<16x16xi32>
    %c16_i32_12 = arith.constant 16 : i32
    %21 = arith.muli %arg0, %c16_i32_12 : i32
    %22 = vector.broadcast %21 : i32 to vector<16x16xi32>
    %23 = arith.addi %20, %22 : vector<16x16xi32>
    %24 = tpu.iota {dimensions = array<i32: 1>} : vector<16x16xi32>
    %25 = arith.cmpi eq, %23, %24 : vector<16x16xi32>
    %c8_i32 = arith.constant 8 : i32
    %26 = vector.broadcast %c8_i32 : i32 to vector<16x16xi32>
    %27 = arith.cmpi sge, %24, %26 : vector<16x16xi32>
    %28 = arith.ori %25, %27 : vector<16x16xi1>
    %cst_13 = arith.constant 1.000000e+09 : f32
    %cst_14 = arith.constant 0.000000e+00 : f32
    %29 = vector.broadcast %cst_13 : f32 to vector<16x16xf32>
    %30 = vector.broadcast %cst_14 : f32 to vector<16x16xf32>
    %31 = arith.select %28, %29, %30 : vector<16x16xi1>, vector<16x16xf32>
    %cst_15 = arith.constant 1.000000e+09 : f32
    %cst_16 = arith.constant 0.000000e+00 : f32
    %32 = vector.broadcast %cst_15 : f32 to vector<16x16xf32>
    %33 = vector.broadcast %cst_16 : f32 to vector<16x16xf32>
    %34 = arith.select %27, %32, %33 : vector<16x16xi1>, vector<16x16xf32>
    %35 = arith.subf %10, %34 : vector<16x16xf32>
    %36 = arith.subf %16, %34 : vector<16x16xf32>
    %37 = arith.subf %13, %31 : vector<16x16xf32>
    %38 = arith.subf %19, %31 : vector<16x16xf32>
    %39 = arith.extf %5 : vector<16x128xbf16> to vector<16x128xf32>
    %40 = arith.extf %7 : vector<16x128xbf16> to vector<16x128xf32>
    %41 = arith.mulf %39, %40 : vector<16x128xf32>
    %cst_17 = arith.constant dense<0.000000e+00> : vector<16xf32>
    %42 = vector.multi_reduction <add>, %41, %cst_17 [1] : vector<16x128xf32> to vector<16xf32>
    %43 = vector.shape_cast %42 : vector<16xf32> to vector<16x1xf32>
    %cst_18 = arith.constant 2.000000e+01 : f32
    %44 = vector.broadcast %cst_18 : f32 to vector<16x1xf32>
    %45 = arith.mulf %43, %44 : vector<16x1xf32>
    %cst_19 = arith.constant 2.000000e+01 : f32
    %46 = vector.broadcast %cst_19 : f32 to vector<16x16xf32>
    %47 = arith.subf %35, %46 : vector<16x16xf32>
    %48 = math.exp %47 : vector<16x16xf32>
    %cst_20 = arith.constant dense<0.000000e+00> : vector<16xf32>
    %49 = vector.multi_reduction <add>, %48, %cst_20 [1] : vector<16x16xf32> to vector<16xf32>
    %50 = vector.shape_cast %49 : vector<16xf32> to vector<16x1xf32>
    %cst_21 = arith.constant 2.000000e+01 : f32
    %51 = vector.broadcast %cst_21 : f32 to vector<16x16xf32>
    %52 = arith.subf %37, %51 : vector<16x16xf32>
    %53 = math.exp %52 : vector<16x16xf32>
    %cst_22 = arith.constant dense<0.000000e+00> : vector<16xf32>
    %54 = vector.multi_reduction <add>, %53, %cst_22 [1] : vector<16x16xf32> to vector<16xf32>
    %55 = vector.shape_cast %54 : vector<16xf32> to vector<16x1xf32>
    %56 = arith.addf %50, %55 : vector<16x1xf32>
    %57 = math.log %56 : vector<16x1xf32>
    %cst_23 = arith.constant 2.000000e+01 : f32
    %58 = vector.broadcast %cst_23 : f32 to vector<16x1xf32>
    %59 = arith.addf %58, %57 : vector<16x1xf32>
    %60 = arith.subf %59, %45 : vector<16x1xf32>
    %cst_24 = arith.constant 2.000000e+01 : f32
    %61 = vector.broadcast %cst_24 : f32 to vector<16x16xf32>
    %62 = arith.subf %36, %61 : vector<16x16xf32>
    %63 = math.exp %62 : vector<16x16xf32>
    %cst_25 = arith.constant dense<0.000000e+00> : vector<16xf32>
    %64 = vector.multi_reduction <add>, %63, %cst_25 [1] : vector<16x16xf32> to vector<16xf32>
    %65 = vector.shape_cast %64 : vector<16xf32> to vector<16x1xf32>
    %cst_26 = arith.constant 2.000000e+01 : f32
    %66 = vector.broadcast %cst_26 : f32 to vector<16x16xf32>
    %67 = arith.subf %38, %66 : vector<16x16xf32>
    %68 = math.exp %67 : vector<16x16xf32>
    %cst_27 = arith.constant dense<0.000000e+00> : vector<16xf32>
    %69 = vector.multi_reduction <add>, %68, %cst_27 [1] : vector<16x16xf32> to vector<16xf32>
    %70 = vector.shape_cast %69 : vector<16xf32> to vector<16x1xf32>
    %71 = arith.addf %65, %70 : vector<16x1xf32>
    %72 = math.log %71 : vector<16x1xf32>
    %cst_28 = arith.constant 2.000000e+01 : f32
    %73 = vector.broadcast %cst_28 : f32 to vector<16x1xf32>
    %74 = arith.addf %73, %72 : vector<16x1xf32>
    %75 = arith.subf %74, %45 : vector<16x1xf32>
    %76 = tpu.iota {dimensions = array<i32: 0>} : vector<16x1xi32>
    %c16_i32_29 = arith.constant 16 : i32
    %77 = arith.muli %arg0, %c16_i32_29 : i32
    %78 = vector.broadcast %77 : i32 to vector<16x1xi32>
    %79 = arith.addi %76, %78 : vector<16x1xi32>
    %c8_i32_30 = arith.constant 8 : i32
    %80 = vector.broadcast %c8_i32_30 : i32 to vector<16x1xi32>
    %81 = arith.cmpi slt, %79, %80 : vector<16x1xi32>
    %cst_31 = arith.constant 1.000000e+00 : f32
    %cst_32 = arith.constant 0.000000e+00 : f32
    %82 = vector.broadcast %cst_31 : f32 to vector<16x1xf32>
    %83 = vector.broadcast %cst_32 : f32 to vector<16x1xf32>
    %84 = arith.select %81, %82, %83 : vector<16x1xi1>, vector<16x1xf32>
    %85 = arith.mulf %60, %84 : vector<16x1xf32>
    %86 = arith.mulf %75, %84 : vector<16x1xf32>
    %87 = vector.shape_cast %85 : vector<16x1xf32> to vector<1x16x1xf32>
    %cst_33 = arith.constant dense<0.000000e+00> : vector<1xf32>
    %88 = vector.multi_reduction <add>, %87, %cst_33 [1, 2] : vector<1x16x1xf32> to vector<1xf32>
    %89 = vector.shape_cast %88 : vector<1xf32> to vector<1x1x1xf32>
    %90 = vector.extract %89[0, 0, 0] : f32 from vector<1x1x1xf32>
    %c0_34 = arith.constant 0 : index
    %c0_35 = arith.constant 0 : index
    %91 = memref.load %arg3[%c0_34, %c0_35] : memref<1x2xf32, #tpu.memory_space<smem>>
    memref.store %90, %arg3[%c0_34, %c0_35] : memref<1x2xf32, #tpu.memory_space<smem>>
    %92 = vector.shape_cast %86 : vector<16x1xf32> to vector<1x16x1xf32>
    %cst_36 = arith.constant dense<0.000000e+00> : vector<1xf32>
    %93 = vector.multi_reduction <add>, %92, %cst_36 [1, 2] : vector<1x16x1xf32> to vector<1xf32>
    %94 = vector.shape_cast %93 : vector<1xf32> to vector<1x1x1xf32>
    %95 = vector.extract %94[0, 0, 0] : f32 from vector<1x1x1xf32>
    %c0_37 = arith.constant 0 : index
    %c1 = arith.constant 1 : index
    %96 = memref.load %arg3[%c0_37, %c1] : memref<1x2xf32, #tpu.memory_space<smem>>
    memref.store %95, %arg3[%c0_37, %c1] : memref<1x2xf32, #tpu.memory_space<smem>>
    return
  }
  func.func @transform_0(%arg0: i32) -> (i32, i32) {
    %c0_i32 = arith.constant 0 : i32
    %c0_i32_0 = arith.constant 0 : i32
    %c0_i32_1 = arith.constant 0 : i32
    return %c0_i32, %c0_i32_0 : i32, i32
  }
  func.func @transform_1(%arg0: i32) -> (i32, i32) {
    %c0_i32 = arith.constant 0 : i32
    %c0_i32_0 = arith.constant 0 : i32
    %c0_i32_1 = arith.constant 0 : i32
    return %c0_i32, %c0_i32_0 : i32, i32
  }
  func.func @transform_2(%arg0: i32) -> (i32, i32) {
    %c0_i32 = arith.constant 0 : i32
    %c0_i32_0 = arith.constant 0 : i32
    return %arg0, %c0_i32 : i32, i32
  }
}

module attributes {stable_mosaic.version = 11 : i64} {
  func.func @_icl_tile_kernel(%arg0: i32, %arg1: memref<16x128xbf16, #tpu.memory_space<vmem>>, %arg2: memref<16x128xbf16, #tpu.memory_space<vmem>>, %arg3: memref<1x2xf32, #tpu.memory_space<smem>>) attributes {dimension_semantics = [#tpu.dimension_semantics<parallel>], iteration_bounds = array<i64: 1>, scalar_prefetch = 0 : i64, scratch_operands = 0 : i64, tpu.core_type = #tpu.core_type<tc>, window_params = [{pipeline_mode = #tpu.pipeline_mode<synchronous>, transform_indices = @transform_0, window_bounds = array<i64: 16, 128>}, {pipeline_mode = #tpu.pipeline_mode<synchronous>, transform_indices = @transform_1, window_bounds = array<i64: 16, 128>}, {transform_indices = @transform_2, window_bounds = array<i64: 1, 2>}]} {
    %c0 = arith.constant 0 : index
    %c0_0 = arith.constant 0 : index
    %0 = vector.load %arg1[%c0, %c0_0] : memref<16x128xbf16, #tpu.memory_space<vmem>>, vector<16x128xbf16>
    %c0_1 = arith.constant 0 : index
    %c0_2 = arith.constant 0 : index
    %1 = vector.load %arg2[%c0_1, %c0_2] : memref<16x128xbf16, #tpu.memory_space<vmem>>, vector<16x128xbf16>
    %c16_i32 = arith.constant 16 : i32
    %2 = arith.muli %arg0, %c16_i32 : i32
    %3 = tpu.assume_multiple %2, 16 : i32
    %4 = arith.index_cast %3 : i32 to index
    %c0_3 = arith.constant 0 : index
    %5 = vector.load %arg1[%4, %c0_3] : memref<16x128xbf16, #tpu.memory_space<vmem>>, vector<16x128xbf16>
    %6 = arith.index_cast %3 : i32 to index
    %c0_4 = arith.constant 0 : index
    %7 = vector.load %arg2[%6, %c0_4] : memref<16x128xbf16, #tpu.memory_space<vmem>>, vector<16x128xbf16>
    %cst = arith.constant dense<0.000000e+00> : vector<16x16xf32>
    %8 = tpu.matmul %5, %1, %cst {dimension_numbers = #tpu.dot_dimension_numbers<[1], [1], [0], [0], [0, 0, 1, 0], [], []>} : vector<16x128xbf16>, vector<16x128xbf16>, vector<16x16xf32> -> vector<16x16xf32>
    %cst_5 = arith.constant 2.000000e+01 : f32
    %9 = vector.broadcast %cst_5 : f32 to vector<16x16xf32>
    %10 = arith.mulf %8, %9 : vector<16x16xf32>
    %cst_6 = arith.constant dense<0.000000e+00> : vector<16x16xf32>
    %11 = tpu.matmul %5, %0, %cst_6 {dimension_numbers = #tpu.dot_dimension_numbers<[1], [1], [0], [0], [0, 0, 1, 0], [], []>} : vector<16x128xbf16>, vector<16x128xbf16>, vector<16x16xf32> -> vector<16x16xf32>
    %cst_7 = arith.constant 2.000000e+01 : f32
    %12 = vector.broadcast %cst_7 : f32 to vector<16x16xf32>
    %13 = arith.mulf %11, %12 : vector<16x16xf32>
    %cst_8 = arith.constant dense<0.000000e+00> : vector<16x16xf32>
    %14 = tpu.matmul %7, %0, %cst_8 {dimension_numbers = #tpu.dot_dimension_numbers<[1], [1], [0], [0], [0, 0, 1, 0], [], []>} : vector<16x128xbf16>, vector<16x128xbf16>, vector<16x16xf32> -> vector<16x16xf32>
    %cst_9 = arith.constant 2.000000e+01 : f32
    %15 = vector.broadcast %cst_9 : f32 to vector<16x16xf32>
    %16 = arith.mulf %14, %15 : vector<16x16xf32>
    %cst_10 = arith.constant dense<0.000000e+00> : vector<16x16xf32>
    %17 = tpu.matmul %7, %1, %cst_10 {dimension_numbers = #tpu.dot_dimension_numbers<[1], [1], [0], [0], [0, 0, 1, 0], [], []>} : vector<16x128xbf16>, vector<16x128xbf16>, vector<16x16xf32> -> vector<16x16xf32>
    %cst_11 = arith.constant 2.000000e+01 : f32
    %18 = vector.broadcast %cst_11 : f32 to vector<16x16xf32>
    %19 = arith.mulf %17, %18 : vector<16x16xf32>
    %20 = tpu.iota {dimensions = array<i32: 0>} : vector<16x16xi32>
    %c16_i32_12 = arith.constant 16 : i32
    %21 = arith.muli %arg0, %c16_i32_12 : i32
    %22 = vector.broadcast %21 : i32 to vector<16x16xi32>
    %23 = arith.addi %20, %22 : vector<16x16xi32>
    %24 = tpu.iota {dimensions = array<i32: 1>} : vector<16x16xi32>
    %25 = arith.cmpi eq, %23, %24 : vector<16x16xi32>
    %c8_i32 = arith.constant 8 : i32
    %26 = vector.broadcast %c8_i32 : i32 to vector<16x16xi32>
    %27 = arith.cmpi sge, %24, %26 : vector<16x16xi32>
    %28 = arith.ori %25, %27 : vector<16x16xi1>
    %cst_13 = arith.constant 1.000000e+09 : f32
    %cst_14 = arith.constant 0.000000e+00 : f32
    %29 = vector.broadcast %cst_13 : f32 to vector<16x16xf32>
    %30 = vector.broadcast %cst_14 : f32 to vector<16x16xf32>
    %31 = arith.select %28, %29, %30 : vector<16x16xi1>, vector<16x16xf32>
    %cst_15 = arith.constant 1.000000e+09 : f32
    %cst_16 = arith.constant 0.000000e+00 : f32
    %32 = vector.broadcast %cst_15 : f32 to vector<16x16xf32>
    %33 = vector.broadcast %cst_16 : f32 to vector<16x16xf32>
    %34 = arith.select %27, %32, %33 : vector<16x16xi1>, vector<16x16xf32>
    %35 = arith.subf %10, %34 : vector<16x16xf32>
    %36 = arith.subf %16, %34 : vector<16x16xf32>
    %37 = arith.subf %13, %31 : vector<16x16xf32>
    %38 = arith.subf %19, %31 : vector<16x16xf32>
    %39 = arith.extf %5 : vector<16x128xbf16> to vector<16x128xf32>
    %40 = arith.extf %7 : vector<16x128xbf16> to vector<16x128xf32>
    %41 = arith.mulf %39, %40 : vector<16x128xf32>
    %cst_17 = arith.constant dense<0.000000e+00> : vector<16xf32>
    %42 = vector.multi_reduction <add>, %41, %cst_17 [1] : vector<16x128xf32> to vector<16xf32>
    %43 = vector.shape_cast %42 : vector<16xf32> to vector<16x1xf32>
    %cst_18 = arith.constant 2.000000e+01 : f32
    %44 = vector.broadcast %cst_18 : f32 to vector<16x1xf32>
    %45 = arith.mulf %43, %44 : vector<16x1xf32>
    %cst_19 = arith.constant 2.000000e+01 : f32
    %46 = vector.broadcast %cst_19 : f32 to vector<16x16xf32>
    %47 = arith.subf %35, %46 : vector<16x16xf32>
    %48 = math.exp %47 : vector<16x16xf32>
    %cst_20 = arith.constant dense<0.000000e+00> : vector<16xf32>
    %49 = vector.multi_reduction <add>, %48, %cst_20 [1] : vector<16x16xf32> to vector<16xf32>
    %50 = vector.shape_cast %49 : vector<16xf32> to vector<16x1xf32>
    %cst_21 = arith.constant 2.000000e+01 : f32
    %51 = vector.broadcast %cst_21 : f32 to vector<16x16xf32>
    %52 = arith.subf %37, %51 : vector<16x16xf32>
    %53 = math.exp %52 : vector<16x16xf32>
    %cst_22 = arith.constant dense<0.000000e+00> : vector<16xf32>
    %54 = vector.multi_reduction <add>, %53, %cst_22 [1] : vector<16x16xf32> to vector<16xf32>
    %55 = vector.shape_cast %54 : vector<16xf32> to vector<16x1xf32>
    %56 = arith.addf %50, %55 : vector<16x1xf32>
    %57 = math.log %56 : vector<16x1xf32>
    %cst_23 = arith.constant 2.000000e+01 : f32
    %58 = vector.broadcast %cst_23 : f32 to vector<16x1xf32>
    %59 = arith.addf %58, %57 : vector<16x1xf32>
    %60 = arith.subf %59, %45 : vector<16x1xf32>
    %cst_24 = arith.constant 2.000000e+01 : f32
    %61 = vector.broadcast %cst_24 : f32 to vector<16x16xf32>
    %62 = arith.subf %36, %61 : vector<16x16xf32>
    %63 = math.exp %62 : vector<16x16xf32>
    %cst_25 = arith.constant dense<0.000000e+00> : vector<16xf32>
    %64 = vector.multi_reduction <add>, %63, %cst_25 [1] : vector<16x16xf32> to vector<16xf32>
    %65 = vector.shape_cast %64 : vector<16xf32> to vector<16x1xf32>
    %cst_26 = arith.constant 2.000000e+01 : f32
    %66 = vector.broadcast %cst_26 : f32 to vector<16x16xf32>
    %67 = arith.subf %38, %66 : vector<16x16xf32>
    %68 = math.exp %67 : vector<16x16xf32>
    %cst_27 = arith.constant dense<0.000000e+00> : vector<16xf32>
    %69 = vector.multi_reduction <add>, %68, %cst_27 [1] : vector<16x16xf32> to vector<16xf32>
    %70 = vector.shape_cast %69 : vector<16xf32> to vector<16x1xf32>
    %71 = arith.addf %65, %70 : vector<16x1xf32>
    %72 = math.log %71 : vector<16x1xf32>
    %cst_28 = arith.constant 2.000000e+01 : f32
    %73 = vector.broadcast %cst_28 : f32 to vector<16x1xf32>
    %74 = arith.addf %73, %72 : vector<16x1xf32>
    %75 = arith.subf %74, %45 : vector<16x1xf32>
    %76 = tpu.iota {dimensions = array<i32: 0>} : vector<16x1xi32>
    %c16_i32_29 = arith.constant 16 : i32
    %77 = arith.muli %arg0, %c16_i32_29 : i32
    %78 = vector.broadcast %77 : i32 to vector<16x1xi32>
    %79 = arith.addi %76, %78 : vector<16x1xi32>
    %c8_i32_30 = arith.constant 8 : i32
    %80 = vector.broadcast %c8_i32_30 : i32 to vector<16x1xi32>
    %81 = arith.cmpi slt, %79, %80 : vector<16x1xi32>
    %cst_31 = arith.constant 1.000000e+00 : f32
    %cst_32 = arith.constant 0.000000e+00 : f32
    %82 = vector.broadcast %cst_31 : f32 to vector<16x1xf32>
    %83 = vector.broadcast %cst_32 : f32 to vector<16x1xf32>
    %84 = arith.select %81, %82, %83 : vector<16x1xi1>, vector<16x1xf32>
    %85 = arith.mulf %60, %84 : vector<16x1xf32>
    %86 = arith.mulf %75, %84 : vector<16x1xf32>
    %87 = vector.shape_cast %85 : vector<16x1xf32> to vector<1x16x1xf32>
    %cst_33 = arith.constant dense<0.000000e+00> : vector<1xf32>
    %88 = vector.multi_reduction <add>, %87, %cst_33 [1, 2] : vector<1x16x1xf32> to vector<1xf32>
    %89 = vector.shape_cast %88 : vector<1xf32> to vector<1x1x1xf32>
    %90 = vector.extract %89[0, 0, 0] : f32 from vector<1x1x1xf32>
    %c0_34 = arith.constant 0 : index
    %c0_35 = arith.constant 0 : index
    %91 = memref.load %arg3[%c0_34, %c0_35] : memref<1x2xf32, #tpu.memory_space<smem>>
    memref.store %90, %arg3[%c0_34, %c0_35] : memref<1x2xf32, #tpu.memory_space<smem>>
    %92 = vector.shape_cast %86 : vector<16x1xf32> to vector<1x16x1xf32>
    %cst_36 = arith.constant dense<0.000000e+00> : vector<1xf32>
    %93 = vector.multi_reduction <add>, %92, %cst_36 [1, 2] : vector<1x16x1xf32> to vector<1xf32>
    %94 = vector.shape_cast %93 : vector<1xf32> to vector<1x1x1xf32>
    %95 = vector.extract %94[0, 0, 0] : f32 from vector<1x1x1xf32>
    %c0_37 = arith.constant 0 : index
    %c1 = arith.constant 1 : index
    %96 = memref.load %arg3[%c0_37, %c1] : memref<1x2xf32, #tpu.memory_space<smem>>
    memref.store %95, %arg3[%c0_37, %c1] : memref<1x2xf32, #tpu.memory_space<smem>>
    return
  }
  func.func @transform_0(%arg0: i32) -> (i32, i32) {
    %c0_i32 = arith.constant 0 : i32
    %c0_i32_0 = arith.constant 0 : i32
    %c0_i32_1 = arith.constant 0 : i32
    return %c0_i32, %c0_i32_0 : i32, i32
  }
  func.func @transform_1(%arg0: i32) -> (i32, i32) {
    %c0_i32 = arith.constant 0 : i32
    %c0_i32_0 = arith.constant 0 : i32
    %c0_i32_1 = arith.constant 0 : i32
    return %c0_i32, %c0_i32_0 : i32, i32
  }
  func.func @transform_2(%arg0: i32) -> (i32, i32) {
    %c0_i32 = arith.constant 0 : i32
    %c0_i32_0 = arith.constant 0 : i32
    return %arg0, %c0_i32 : i32, i32
  }
}

</mosaic_0001>

<llo_original>
// kernel: tpu_custom_call.1
$region0: #{tpu_custom_call.1}
  #allocation0 [shape = 'u32[]', space=smem, size = 0x4, offset = 0x4, fixed_abs, tag = 'smem constant byte address 0x4 - core index']
  #allocation1 [shape = 'u32[144,128]{1,0:T(1,128)}', space=vmem, size = 0x12000, scoped, tag = 'internal scratch']
  %s0 = inlined_call_operand.hbm [shape: bf16[16,128], index: 0, kind: input, shape index: {}]
  %s1 = inlined_call_operand.hbm [shape: bf16[16,128], index: 1, kind: input, shape index: {}]
  %s2 = inlined_call_operand.hbm [shape: f32[1,2], index: 2, kind: output, shape index: {}]
  %s3 = sld [smem:[#allocation0]]
  $region26: #{tpu_custom_call.1} parent=0
    _
  %s5 = ssub.s32 1, %s3
  %s6 = scalar_select 0, %s5, %s3
  $region1: #{tpu_custom_call.1} parent=0
    #allocation2 [shape = 'u8[4096]{0}', space=vmem, size = 0x1000, scoped, tag = 'input window, operand 0, single buffered']
    #allocation3 [shape = 's32[1]{0}', space=sflag, size = 0x4, scoped, tag = 'scoped memory for tpu_custom_call.1']
    #allocation4 [shape = 's32[1]{0}', space=sflag, size = 0x4, scoped, tag = 'scoped memory for tpu_custom_call.1']
    #allocation5 [shape = 'u8[4096]{0}', space=vmem, size = 0x1000, scoped, tag = 'input window, operand 1, single buffered']
    #allocation6 [shape = 's32[1]{0}', space=sflag, size = 0x4, scoped, tag = 'scoped memory for tpu_custom_call.1']
    #allocation7 [shape = 'u8[512]{0}', space=smem, size = 0x200, scoped, tag = 'output window, operand 0, single buffered']
    %7 = vsyncpa [#allocation3], 0
    %8 = vsyncpa [#allocation6], 0
    %9 = vsyncpa [#allocation4], 0
    // Predicated region
    $region2: #{tpu_custom_call.1} parent=1 // pred_check
      _
    $region3: #{tpu_custom_call.1} parent=1 // pred_check_branch
      %11 = sbr.rel (0) target = $region5
    $region4: #{tpu_custom_call.1} parent=1 // pred_region
      %s13 = ssub.s32 128, 128
      %14 = vsyncadd [#allocation3], %s13
      %s15 = sshll.u32 [#allocation2], 4
      %s16 = int_to_ptr.vmem [resolvable:$true] %s15
      %21 = dma.hbm_to_vmem [thread:$0]  %s0, 128, %s16, [#allocation3], 64, 64, 4
    $region5: #{tpu_custom_call.1} parent=1 // pred_fallthru
      _
    // Predicated region
    $region6: #{tpu_custom_call.1} parent=1 // pred_check
      _
    $region7: #{tpu_custom_call.1} parent=1 // pred_check_branch
      %23 = sbr.rel (0) target = $region9
    $region8: #{tpu_custom_call.1} parent=1 // pred_region
      %s25 = ssub.s32 128, 128
      %26 = vsyncadd [#allocation6], %s25
      %s27 = sshll.u32 [#allocation5], 4
      %s28 = int_to_ptr.vmem [resolvable:$true] %s27
      %33 = dma.hbm_to_vmem [thread:$0]  %s1, 128, %s28, [#allocation6], 64, 64, 4
    $region9: #{tpu_custom_call.1} parent=1 // pred_fallthru
      _
    // Predicated region
    $region10: #{tpu_custom_call.1} parent=1 // pred_check
      _
    $region11: #{tpu_custom_call.1} parent=1 // pred_check_branch
      %35 = sbr.rel (0) target = $region13
    $region12: #{tpu_custom_call.1} parent=1 // pred_region
      %36 = dma.done [#allocation3], 128
    $region13: #{tpu_custom_call.1} parent=1 // pred_fallthru
      _
    // Predicated region
    $region14: #{tpu_custom_call.1} parent=1 // pred_check
      _
    $region15: #{tpu_custom_call.1} parent=1 // pred_check_branch
      %38 = sbr.rel (0) target = $region17
    $region16: #{tpu_custom_call.1} parent=1 // pred_region
      %39 = dma.done [#allocation6], 128
    $region17: #{tpu_custom_call.1} parent=1 // pred_fallthru
      _
    %v41 = vld [vmem:[#allocation2] sm:$0xf]
    %v42 = vld [vmem:[#allocation2 + $0x4] sm:$0xf]
    %v43 = vld [vmem:[#allocation5] sm:$0xf]
    %v44 = vld [vmem:[#allocation5 + $0x4] sm:$0xf]
    %s45 = smul.u32 0, 16
    %s46 = sshra.s32 %s45, 3
    %s47 = sand.u32 %s45, 7
    %s48 = smul.addr %s46, 4
    %s49 = scalar_lea.vmem [#allocation2], %s48
    %v50 = vld [vmem:[%s49] sm:$0xf]
    %v51 = vld [vmem:[%s49 + $0x4] sm:$0xf]
    %s52 = smul.addr %s46, 4
    %s53 = scalar_lea.vmem [#allocation5], %s52
    %v54 = vld [vmem:[%s53] sm:$0xf]
    %v55 = vld [vmem:[%s53 + $0x4] sm:$0xf]
    %v58 = vunpack.c.l.b16 %v50
    %v59 = vunpack.c.l.b16 %v51
    %v60 = vpack.c.b16 %v59, %v58
    %v64 = vunpack.c.l.b16 %v43
    %v65 = vunpack.c.l.b16 %v44
    %v66 = vpack.c.b16 %v65, %v64
    %68 = vmatprep.subr.bf16.mxu0 0
    %69 = vmatpush1.bf16.xpose.msra.mxu0 %v66
    %70 = vmatprep.subr.bf16.mxu0 0
    %71 = vmatpush1.bf16.xpose.msra.mxu0 0
    %72 = vmatprep.subr.bf16.mxu0 0
    %73 = vmatpush1.bf16.xpose.msra.mxu0 0
    %74 = vmatprep.subr.bf16.mxu0 0
    %75 = vmatpush1.bf16.xpose.msra.mxu0 0
    %76 = vmatprep.subr.bf16.mxu0 0
    %77 = vmatpush1.bf16.xpose.msra.mxu0 0
    %78 = vmatprep.subr.bf16.mxu0 0
    %79 = vmatpush1.bf16.xpose.msra.mxu0 0
    %80 = vmatprep.subr.bf16.mxu0 0
    %81 = vmatpush1.bf16.xpose.msra.mxu0 0
    %82 = vmatprep.subr.bf16.mxu0 0
    %83 = vmatpush1.bf16.xpose.msra.mxu0 0
    %84 = vmatprep.subr.bf16.mxu0 0
    %85 = vmatpush1.bf16.xpose.msra.mxu0 0
    %86 = vmatprep.subr.bf16.mxu0 0
    %87 = vmatpush1.bf16.xpose.msra.mxu0 0
    %88 = vmatprep.subr.bf16.mxu0 0
    %89 = vmatpush1.bf16.xpose.msra.mxu0 0
    %90 = vmatprep.subr.bf16.mxu0 0
    %91 = vmatpush1.bf16.xpose.msra.mxu0 0
    %92 = vmatprep.subr.bf16.mxu0 0
    %93 = vmatpush1.bf16.xpose.msra.mxu0 0
    %94 = vmatprep.subr.bf16.mxu0 0
    %95 = vmatpush1.bf16.xpose.msra.mxu0 0
    %96 = vmatprep.subr.bf16.mxu0 0
    %97 = vmatpush1.bf16.xpose.msra.mxu0 0
    %98 = vmatprep.subr.bf16.mxu0 0
    %99 = vmatpush1.bf16.xpose.msra.mxu0 0
    %100 = vmatprep.mubr.bf16.mxu0 0
    %101 = vmatmul.mubr.bf16.gmra.mrb[0].mxu0 %v60
    %v102 = vpop.f32.mrb[0].mxu0
    %v103 = vadd.f32 0.0, %v102
    %v104 = vpop.f32.mrb[0].mxu0
    %v105 = vpop.f32.mrb[0].mxu0
    %v106 = vadd.f32 0.0, %v105
    %v107 = vpop.f32.mrb[0].mxu0
    %108 = vdwg.mxu0
    %v109 = vmul.f32 %v103, 20.0
    %v110 = vmul.f32 %v106, 20.0
    %v113 = vunpack.c.l.b16 %v41
    %v114 = vunpack.c.l.b16 %v42
    %v115 = vpack.c.b16 %v114, %v113
    %117 = vmatprep.subr.bf16.mxu0 0
    %118 = vmatpush1.bf16.xpose.msra.mxu0 %v115
    %119 = vmatprep.subr.bf16.mxu0 0
    %120 = vmatpush1.bf16.xpose.msra.mxu0 0
    %121 = vmatprep.subr.bf16.mxu0 0
    %122 = vmatpush1.bf16.xpose.msra.mxu0 0
    %123 = vmatprep.subr.bf16.mxu0 0
    %124 = vmatpush1.bf16.xpose.msra.mxu0 0
    %125 = vmatprep.subr.bf16.mxu0 0
    %126 = vmatpush1.bf16.xpose.msra.mxu0 0
    %127 = vmatprep.subr.bf16.mxu0 0
    %128 = vmatpush1.bf16.xpose.msra.mxu0 0
    %129 = vmatprep.subr.bf16.mxu0 0
    %130 = vmatpush1.bf16.xpose.msra.mxu0 0
    %131 = vmatprep.subr.bf16.mxu0 0
    %132 = vmatpush1.bf16.xpose.msra.mxu0 0
    %133 = vmatprep.subr.bf16.mxu0 0
    %134 = vmatpush1.bf16.xpose.msra.mxu0 0
    %135 = vmatprep.subr.bf16.mxu0 0
    %136 = vmatpush1.bf16.xpose.msra.mxu0 0
    %137 = vmatprep.subr.bf16.mxu0 0
    %138 = vmatpush1.bf16.xpose.msra.mxu0 0
    %139 = vmatprep.subr.bf16.mxu0 0
    %140 = vmatpush1.bf16.xpose.msra.mxu0 0
    %141 = vmatprep.subr.bf16.mxu0 0
    %142 = vmatpush1.bf16.xpose.msra.mxu0 0
    %143 = vmatprep.subr.bf16.mxu0 0
    %144 = vmatpush1.bf16.xpose.msra.mxu0 0
    %145 = vmatprep.subr.bf16.mxu0 0
    %146 = vmatpush1.bf16.xpose.msra.mxu0 0
    %147 = vmatprep.subr.bf16.mxu0 0
    %148 = vmatpush1.bf16.xpose.msra.mxu0 0
    %149 = vmatprep.mubr.bf16.mxu0 0
    %150 = vmatmul.mubr.bf16.gmra.mrb[0].mxu0 %v60
    %v151 = vpop.f32.mrb[0].mxu0
    %v152 = vadd.f32 0.0, %v151
    %v153 = vpop.f32.mrb[0].mxu0
    %v154 = vpop.f32.mrb[0].mxu0
    %v155 = vadd.f32 0.0, %v154
    %v156 = vpop.f32.mrb[0].mxu0
    %157 = vdwg.mxu0
    %v158 = vmul.f32 %v152, 20.0
    %v159 = vmul.f32 %v155, 20.0
    %v162 = vunpack.c.l.b16 %v54
    %v163 = vunpack.c.l.b16 %v55
    %v164 = vpack.c.b16 %v163, %v162
    %166 = vmatprep.subr.bf16.mxu0 0
    %167 = vmatpush1.bf16.xpose.msra.mxu0 %v115
    %168 = vmatprep.subr.bf16.mxu0 0
    %169 = vmatpush1.bf16.xpose.msra.mxu0 0
    %170 = vmatprep.subr.bf16.mxu0 0
    %171 = vmatpush1.bf16.xpose.msra.mxu0 0
    %172 = vmatprep.subr.bf16.mxu0 0
    %173 = vmatpush1.bf16.xpose.msra.mxu0 0
    %174 = vmatprep.subr.bf16.mxu0 0
    %175 = vmatpush1.bf16.xpose.msra.mxu0 0
    %176 = vmatprep.subr.bf16.mxu0 0
    %177 = vmatpush1.bf16.xpose.msra.mxu0 0
    %178 = vmatprep.subr.bf16.mxu0 0
    %179 = vmatpush1.bf16.xpose.msra.mxu0 0
    %180 = vmatprep.subr.bf16.mxu0 0
    %181 = vmatpush1.bf16.xpose.msra.mxu0 0
    %182 = vmatprep.subr.bf16.mxu0 0
    %183 = vmatpush1.bf16.xpose.msra.mxu0 0
    %184 = vmatprep.subr.bf16.mxu0 0
    %185 = vmatpush1.bf16.xpose.msra.mxu0 0
    %186 = vmatprep.subr.bf16.mxu0 0
    %187 = vmatpush1.bf16.xpose.msra.mxu0 0
    %188 = vmatprep.subr.bf16.mxu0 0
    %189 = vmatpush1.bf16.xpose.msra.mxu0 0
    %190 = vmatprep.subr.bf16.mxu0 0
    %191 = vmatpush1.bf16.xpose.msra.mxu0 0
    %192 = vmatprep.subr.bf16.mxu0 0
    %193 = vmatpush1.bf16.xpose.msra.mxu0 0
    %194 = vmatprep.subr.bf16.mxu0 0
    %195 = vmatpush1.bf16.xpose.msra.mxu0 0
    %196 = vmatprep.subr.bf16.mxu0 0
    %197 = vmatpush1.bf16.xpose.msra.mxu0 0
    %198 = vmatprep.mubr.bf16.mxu0 0
    %199 = vmatmul.mubr.bf16.gmra.mrb[0].mxu0 %v164
    %v200 = vpop.f32.mrb[0].mxu0
    %v201 = vadd.f32 0.0, %v200
    %v202 = vpop.f32.mrb[0].mxu0
    %v203 = vpop.f32.mrb[0].mxu0
    %v204 = vadd.f32 0.0, %v203
    %v205 = vpop.f32.mrb[0].mxu0
    %206 = vdwg.mxu0
    %v207 = vmul.f32 %v201, 20.0
    %v208 = vmul.f32 %v204, 20.0
    %209 = vmatprep.subr.bf16.mxu0 0
    %210 = vmatpush1.bf16.xpose.msra.mxu0 %v66
    %211 = vmatprep.subr.bf16.mxu0 0
    %212 = vmatpush1.bf16.xpose.msra.mxu0 0
    %213 = vmatprep.subr.bf16.mxu0 0
    %214 = vmatpush1.bf16.xpose.msra.mxu0 0
    %215 = vmatprep.subr.bf16.mxu0 0
    %216 = vmatpush1.bf16.xpose.msra.mxu0 0
    %217 = vmatprep.subr.bf16.mxu0 0
    %218 = vmatpush1.bf16.xpose.msra.mxu0 0
    %219 = vmatprep.subr.bf16.mxu0 0
    %220 = vmatpush1.bf16.xpose.msra.mxu0 0
    %221 = vmatprep.subr.bf16.mxu0 0
    %222 = vmatpush1.bf16.xpose.msra.mxu0 0
    %223 = vmatprep.subr.bf16.mxu0 0
    %224 = vmatpush1.bf16.xpose.msra.mxu0 0
    %225 = vmatprep.subr.bf16.mxu0 0
    %226 = vmatpush1.bf16.xpose.msra.mxu0 0
    %227 = vmatprep.subr.bf16.mxu0 0
    %228 = vmatpush1.bf16.xpose.msra.mxu0 0
    %229 = vmatprep.subr.bf16.mxu0 0
    %230 = vmatpush1.bf16.xpose.msra.mxu0 0
    %231 = vmatprep.subr.bf16.mxu0 0
    %232 = vmatpush1.bf16.xpose.msra.mxu0 0
    %233 = vmatprep.subr.bf16.mxu0 0
    %234 = vmatpush1.bf16.xpose.msra.mxu0 0
    %235 = vmatprep.subr.bf16.mxu0 0
    %236 = vmatpush1.bf16.xpose.msra.mxu0 0
    %237 = vmatprep.subr.bf16.mxu0 0
    %238 = vmatpush1.bf16.xpose.msra.mxu0 0
    %239 = vmatprep.subr.bf16.mxu0 0
    %240 = vmatpush1.bf16.xpose.msra.mxu0 0
    %241 = vmatprep.mubr.bf16.mxu0 0
    %242 = vmatmul.mubr.bf16.gmra.mrb[0].mxu0 %v164
    %v243 = vpop.f32.mrb[0].mxu0
    %v244 = vadd.f32 0.0, %v243
    %v245 = vpop.f32.mrb[0].mxu0
    %v246 = vpop.f32.mrb[0].mxu0
    %v247 = vadd.f32 0.0, %v246
    %v248 = vpop.f32.mrb[0].mxu0
    %249 = vdwg.mxu0
    %v250 = vmul.f32 %v244, 20.0
    %v251 = vmul.f32 %v247, 20.0
    %v252 = vlaneseq
    %v253 = vshrl.u32 %v252, 7
    %v254 = vadd.s32 %v253, 8
    %v255 = vstv %s45
    %v256 = vadd.s32 %v253, %v255
    %v257 = vadd.s32 %v254, %v255
    %v258 = vlaneseq
    %v259 = vand.u32 %v258, 127
    %vm260 = vcmp.eq.s32.totalorder %v256, %v259
    %vm261 = vcmp.eq.s32.totalorder %v257, %v259
    %vm262 = vcmp.ge.s32.totalorder %v259, 8
    %vm263 = vmor %vm260, %vm262
    %vm264 = vmor %vm261, %vm262
    %v265 = vsel %vm263, 1e+09, 0.0
    %v266 = vsel %vm264, 1e+09, 0.0
    %v267 = vsel %vm262, 1e+09, 0.0
    %v268 = vsub.f32 %v109, %v267
    %v269 = vsub.f32 %v110, %v267
    %v270 = vsub.f32 %v207, %v267
    %v271 = vsub.f32 %v208, %v267
    %v272 = vsub.f32 %v158, %v265
    %v273 = vsub.f32 %v159, %v266
    %v274 = vsub.f32 %v250, %v265
    %v275 = vsub.f32 %v251, %v266
    %v276 = vunpack.c.l.bf16 %v50
    %v277 = vunpack.c.l.bf16 %v51
    %v278 = vunpack.c.l.bf16 %v54
    %v279 = vunpack.c.l.bf16 %v55
    %v280 = vmul.f32 %v276, %v278
    %v281 = vmul.f32 %v277, %v279
    %282 = vadd.xlane.f32.xlu0 %v280
    %v283 = vpop.xlane.xlu0 %282
    %284 = vadd.xlane.f32.xlu0 %v281
    %v285 = vpop.xlane.xlu0 %284
    %v286 = vmul.f32 %v283, 20.0
    %v287 = vmul.f32 %v285, 20.0
    %v288 = vsub.f32 %v268, 20.0
    %v289 = vsub.f32 %v269, 20.0
    %v290 = vmul.f32 %v288, 1.442695
    %v291 = vpow.pop %v290
    %v292 = vmul.f32 %v289, 1.442695
    %v293 = vpow.pop %v292
    %vm294 = vcmask 130048
    %v295 = vsel %vm294, %v291, 0.0
    %296 = vadd.xlane.f32.xlu0 %v295
    %v297 = vpop.xlane.xlu0 %296
    %v298 = vsel %vm294, %v293, 0.0
    %299 = vadd.xlane.f32.xlu0 %v298
    %v300 = vpop.xlane.xlu0 %299
    %v301 = vsub.f32 %v272, 20.0
    %v302 = vsub.f32 %v273, 20.0
    %v303 = vmul.f32 %v301, 1.442695
    %v304 = vpow.pop %v303
    %v305 = vmul.f32 %v302, 1.442695
    %v306 = vpow.pop %v305
    %v307 = vsel %vm294, %v304, 0.0
    %308 = vadd.xlane.f32.xlu0 %v307
    %v309 = vpop.xlane.xlu0 %308
    %v310 = vsel %vm294, %v306, 0.0
    %311 = vadd.xlane.f32.xlu0 %v310
    %v312 = vpop.xlane.xlu0 %311
    %v313 = vadd.f32 %v297, %v309
    %v314 = vadd.f32 %v300, %v312
    %v315 = vlog2.pop %v313
    %v316 = vmul.f32 %v315, 0.6931472
    %v317 = vlog2.pop %v314
    %v318 = vmul.f32 %v317, 0.6931472
    %v319 = vadd.f32 %v316, 20.0
    %v320 = vadd.f32 %v318, 20.0
    %v321 = vsub.f32 %v319, %v286
    %v322 = vsub.f32 %v320, %v287
    %v323 = vsub.f32 %v270, 20.0
    %v324 = vsub.f32 %v271, 20.0
    %v325 = vmul.f32 %v323, 1.442695
    %v326 = vpow.pop %v325
    %v327 = vmul.f32 %v324, 1.442695
    %v328 = vpow.pop %v327
    %v329 = vsel %vm294, %v326, 0.0
    %330 = vadd.xlane.f32.xlu0 %v329
    %v331 = vpop.xlane.xlu0 %330
    %v332 = vsel %vm294, %v328, 0.0
    %333 = vadd.xlane.f32.xlu0 %v332
    %v334 = vpop.xlane.xlu0 %333
    %v335 = vsub.f32 %v274, 20.0
    %v336 = vsub.f32 %v275, 20.0
    %v337 = vmul.f32 %v335, 1.442695
    %v338 = vpow.pop %v337
    %v339 = vmul.f32 %v336, 1.442695
    %v340 = vpow.pop %v339
    %v341 = vsel %vm294, %v338, 0.0
    %342 = vadd.xlane.f32.xlu0 %v341
    %v343 = vpop.xlane.xlu0 %342
    %v344 = vsel %vm294, %v340, 0.0
    %345 = vadd.xlane.f32.xlu0 %v344
    %v346 = vpop.xlane.xlu0 %345
    %v347 = vadd.f32 %v331, %v343
    %v348 = vadd.f32 %v334, %v346
    %v349 = vlog2.pop %v347
    %v350 = vmul.f32 %v349, 0.6931472
    %v351 = vlog2.pop %v348
    %v352 = vmul.f32 %v351, 0.6931472
    %v353 = vadd.f32 %v350, 20.0
    %v354 = vadd.f32 %v352, 20.0
    %v355 = vsub.f32 %v353, %v286
    %v356 = vsub.f32 %v354, %v287
    %vm357 = vcmp.lt.s32.totalorder %v256, 8
    %vm358 = vcmp.lt.s32.totalorder %v257, 8
    %v359 = vsel %vm357, 1.0, 0.0
    %v360 = vsel %vm358, 1.0, 0.0
    %v361 = vmul.f32 %v321, %v359
    %v362 = vmul.f32 %v322, %v360
    %v363 = vmul.f32 %v355, %v359
    %v364 = vmul.f32 %v356, %v360
    %vm365 = vcmask 7168
    %v366 = vsel %vm365, %v361, 0.0
    %v367 = vsel %vm365, %v362, 0.0
    %v368 = vadd.f32 %v366, %v367
    %369 = vadd.xlane.f32.xlu0 %v368
    %v370 = vpop.xlane.xlu0 %369
    %v371 = vrot.slane %v370, 4
    %v372 = vadd.f32 %v370, %v371
    %v373 = vrot.slane %v372, 2
    %v374 = vadd.f32 %v372, %v373
    %v375 = vrot.slane %v374, 1
    %v376 = vadd.f32 %v374, %v375
    %s377 = vtos %v376
    %s378 = scalar_lea.smem [#allocation7], 0
    %379 = sst [smem:[%s378]] %s377
    %v380 = vsel %vm365, %v363, 0.0
    %v381 = vsel %vm365, %v364, 0.0
    %v382 = vadd.f32 %v380, %v381
    %383 = vadd.xlane.f32.xlu0 %v382
    %v384 = vpop.xlane.xlu0 %383
    %v385 = vrot.slane %v384, 4
    %v386 = vadd.f32 %v384, %v385
    %v387 = vrot.slane %v386, 2
    %v388 = vadd.f32 %v386, %v387
    %v389 = vrot.slane %v388, 1
    %v390 = vadd.f32 %v388, %v389
    %s391 = vtos %v390
    %s392 = scalar_lea.smem [#allocation7], 1
    %393 = sst [smem:[%s392]] %s391
    // Predicated region
    $region18: #{tpu_custom_call.1} parent=1 // pred_check
      _
    $region19: #{tpu_custom_call.1} parent=1 // pred_check_branch
      %395 = sbr.rel (0) target = $region21
    $region20: #{tpu_custom_call.1} parent=1 // pred_region
      %s397 = ssub.s32 16, 16
      %398 = vsyncadd [#allocation4], %s397
      %401 = dma.smem_to_hbm [#allocation7], 16, %s2, [#allocation4]
    $region21: #{tpu_custom_call.1} parent=1 // pred_fallthru
      _
    // Predicated region
    $region22: #{tpu_custom_call.1} parent=1 // pred_check
      _
    $region23: #{tpu_custom_call.1} parent=1 // pred_check_branch
      %403 = sbr.rel (0) target = $region25
    $region24: #{tpu_custom_call.1} parent=1 // pred_region
      %404 = dma.done [#allocation4], 16
    $region25: #{tpu_custom_call.1} parent=1 // pred_fallthru
      _
    %405 = sfence
    %406 = vsyncpa [#allocation3], 1
    %407 = vsyncpa [#allocation6], 1
    %408 = vsyncpa [#allocation4], 1

// kernel: tpu_custom_call.1
$region0: #{tpu_custom_call.1}
  #allocation0 [shape = 'u32[]', space=smem, size = 0x4, offset = 0x4, fixed_abs, tag = 'smem constant byte address 0x4 - core index']
  #allocation1 [shape = 'u32[144,128]{1,0:T(1,128)}', space=vmem, size = 0x12000, scoped, tag = 'internal scratch']
  %s0 = inlined_call_operand.hbm [shape: bf16[16,128], index: 0, kind: input, shape index: {}]
  %s1 = inlined_call_operand.hbm [shape: bf16[16,128], index: 1, kind: input, shape index: {}]
  %s2 = inlined_call_operand.hbm [shape: f32[1,2], index: 2, kind: output, shape index: {}]
  %s3 = sld [smem:[#allocation0]]
  $region26: #{tpu_custom_call.1} parent=0
    _
  %s5 = ssub.s32 1, %s3
  %s6 = scalar_select 0, %s5, %s3
  $region1: #{tpu_custom_call.1} parent=0
    #allocation2 [shape = 'u8[4096]{0}', space=vmem, size = 0x1000, scoped, tag = 'input window, operand 0, single buffered']
    #allocation3 [shape = 's32[1]{0}', space=sflag, size = 0x4, scoped, tag = 'scoped memory for tpu_custom_call.1']
    #allocation4 [shape = 's32[1]{0}', space=sflag, size = 0x4, scoped, tag = 'scoped memory for tpu_custom_call.1']
    #allocation5 [shape = 'u8[4096]{0}', space=vmem, size = 0x1000, scoped, tag = 'input window, operand 1, single buffered']
    #allocation6 [shape = 's32[1]{0}', space=sflag, size = 0x4, scoped, tag = 'scoped memory for tpu_custom_call.1']
    #allocation7 [shape = 'u8[512]{0}', space=smem, size = 0x200, scoped, tag = 'output window, operand 0, single buffered']
    %7 = vsyncpa [#allocation3], 0
    %8 = vsyncpa [#allocation6], 0
    %9 = vsyncpa [#allocation4], 0
    // Predicated region
    $region2: #{tpu_custom_call.1} parent=1 // pred_check
      _
    $region3: #{tpu_custom_call.1} parent=1 // pred_check_branch
      %11 = sbr.rel (0) target = $region5
    $region4: #{tpu_custom_call.1} parent=1 // pred_region
      %s13 = ssub.s32 128, 128
      %14 = vsyncadd [#allocation3], %s13
      %s15 = sshll.u32 [#allocation2], 4
      %s16 = int_to_ptr.vmem [resolvable:$true] %s15
      %21 = dma.hbm_to_vmem [thread:$0]  %s0, 128, %s16, [#allocation3], 64, 64, 4
    $region5: #{tpu_custom_call.1} parent=1 // pred_fallthru
      _
    // Predicated region
    $region6: #{tpu_custom_call.1} parent=1 // pred_check
      _
    $region7: #{tpu_custom_call.1} parent=1 // pred_check_branch
      %23 = sbr.rel (0) target = $region9
    $region8: #{tpu_custom_call.1} parent=1 // pred_region
      %s25 = ssub.s32 128, 128
      %26 = vsyncadd [#allocation6], %s25
      %s27 = sshll.u32 [#allocation5], 4
      %s28 = int_to_ptr.vmem [resolvable:$true] %s27
      %33 = dma.hbm_to_vmem [thread:$0]  %s1, 128, %s28, [#allocation6], 64, 64, 4
    $region9: #{tpu_custom_call.1} parent=1 // pred_fallthru
      _
    // Predicated region
    $region10: #{tpu_custom_call.1} parent=1 // pred_check
      _
    $region11: #{tpu_custom_call.1} parent=1 // pred_check_branch
      %35 = sbr.rel (0) target = $region13
    $region12: #{tpu_custom_call.1} parent=1 // pred_region
      %36 = dma.done [#allocation3], 128
    $region13: #{tpu_custom_call.1} parent=1 // pred_fallthru
      _
    // Predicated region
    $region14: #{tpu_custom_call.1} parent=1 // pred_check
      _
    $region15: #{tpu_custom_call.1} parent=1 // pred_check_branch
      %38 = sbr.rel (0) target = $region17
    $region16: #{tpu_custom_call.1} parent=1 // pred_region
      %39 = dma.done [#allocation6], 128
    $region17: #{tpu_custom_call.1} parent=1 // pred_fallthru
      _
    %v41 = vld [vmem:[#allocation2] sm:$0xf]
    %v42 = vld [vmem:[#allocation2 + $0x4] sm:$0xf]
    %v43 = vld [vmem:[#allocation5] sm:$0xf]
    %v44 = vld [vmem:[#allocation5 + $0x4] sm:$0xf]
    %s45 = smul.u32 0, 16
    %s46 = sshra.s32 %s45, 3
    %s47 = sand.u32 %s45, 7
    %s48 = smul.addr %s46, 4
    %s49 = scalar_lea.vmem [#allocation2], %s48
    %v50 = vld [vmem:[%s49] sm:$0xf]
    %v51 = vld [vmem:[%s49 + $0x4] sm:$0xf]
    %s52 = smul.addr %s46, 4
    %s53 = scalar_lea.vmem [#allocation5], %s52
    %v54 = vld [vmem:[%s53] sm:$0xf]
    %v55 = vld [vmem:[%s53 + $0x4] sm:$0xf]
    %v58 = vunpack.c.l.b16 %v50
    %v59 = vunpack.c.l.b16 %v51
    %v60 = vpack.c.b16 %v59, %v58
    %v64 = vunpack.c.l.b16 %v43
    %v65 = vunpack.c.l.b16 %v44
    %v66 = vpack.c.b16 %v65, %v64
    %68 = vmatprep.subr.bf16.mxu0 0
    %69 = vmatpush1.bf16.xpose.msra.mxu0 %v66
    %70 = vmatprep.subr.bf16.mxu0 0
    %71 = vmatpush1.bf16.xpose.msra.mxu0 0
    %72 = vmatprep.subr.bf16.mxu0 0
    %73 = vmatpush1.bf16.xpose.msra.mxu0 0
    %74 = vmatprep.subr.bf16.mxu0 0
    %75 = vmatpush1.bf16.xpose.msra.mxu0 0
    %76 = vmatprep.subr.bf16.mxu0 0
    %77 = vmatpush1.bf16.xpose.msra.mxu0 0
    %78 = vmatprep.subr.bf16.mxu0 0
    %79 = vmatpush1.bf16.xpose.msra.mxu0 0
    %80 = vmatprep.subr.bf16.mxu0 0
    %81 = vmatpush1.bf16.xpose.msra.mxu0 0
    %82 = vmatprep.subr.bf16.mxu0 0
    %83 = vmatpush1.bf16.xpose.msra.mxu0 0
    %84 = vmatprep.subr.bf16.mxu0 0
    %85 = vmatpush1.bf16.xpose.msra.mxu0 0
    %86 = vmatprep.subr.bf16.mxu0 0
    %87 = vmatpush1.bf16.xpose.msra.mxu0 0
    %88 = vmatprep.subr.bf16.mxu0 0
    %89 = vmatpush1.bf16.xpose.msra.mxu0 0
    %90 = vmatprep.subr.bf16.mxu0 0
    %91 = vmatpush1.bf16.xpose.msra.mxu0 0
    %92 = vmatprep.subr.bf16.mxu0 0
    %93 = vmatpush1.bf16.xpose.msra.mxu0 0
    %94 = vmatprep.subr.bf16.mxu0 0
    %95 = vmatpush1.bf16.xpose.msra.mxu0 0
    %96 = vmatprep.subr.bf16.mxu0 0
    %97 = vmatpush1.bf16.xpose.msra.mxu0 0
    %98 = vmatprep.subr.bf16.mxu0 0
    %99 = vmatpush1.bf16.xpose.msra.mxu0 0
    %100 = vmatprep.mubr.bf16.mxu0 0
    %101 = vmatmul.mubr.bf16.gmra.mrb[0].mxu0 %v60
    %v102 = vpop.f32.mrb[0].mxu0
    %v103 = vadd.f32 0.0, %v102
    %v104 = vpop.f32.mrb[0].mxu0
    %v105 = vpop.f32.mrb[0].mxu0
    %v106 = vadd.f32 0.0, %v105
    %v107 = vpop.f32.mrb[0].mxu0
    %108 = vdwg.mxu0
    %v109 = vmul.f32 %v103, 20.0
    %v110 = vmul.f32 %v106, 20.0
    %v113 = vunpack.c.l.b16 %v41
    %v114 = vunpack.c.l.b16 %v42
    %v115 = vpack.c.b16 %v114, %v113
    %117 = vmatprep.subr.bf16.mxu0 0
    %118 = vmatpush1.bf16.xpose.msra.mxu0 %v115
    %119 = vmatprep.subr.bf16.mxu0 0
    %120 = vmatpush1.bf16.xpose.msra.mxu0 0
    %121 = vmatprep.subr.bf16.mxu0 0
    %122 = vmatpush1.bf16.xpose.msra.mxu0 0
    %123 = vmatprep.subr.bf16.mxu0 0
    %124 = vmatpush1.bf16.xpose.msra.mxu0 0
    %125 = vmatprep.subr.bf16.mxu0 0
    %126 = vmatpush1.bf16.xpose.msra.mxu0 0
    %127 = vmatprep.subr.bf16.mxu0 0
    %128 = vmatpush1.bf16.xpose.msra.mxu0 0
    %129 = vmatprep.subr.bf16.mxu0 0
    %130 = vmatpush1.bf16.xpose.msra.mxu0 0
    %131 = vmatprep.subr.bf16.mxu0 0
    %132 = vmatpush1.bf16.xpose.msra.mxu0 0
    %133 = vmatprep.subr.bf16.mxu0 0
    %134 = vmatpush1.bf16.xpose.msra.mxu0 0
    %135 = vmatprep.subr.bf16.mxu0 0
    %136 = vmatpush1.bf16.xpose.msra.mxu0 0
    %137 = vmatprep.subr.bf16.mxu0 0
    %138 = vmatpush1.bf16.xpose.msra.mxu0 0
    %139 = vmatprep.subr.bf16.mxu0 0
    %140 = vmatpush1.bf16.xpose.msra.mxu0 0
    %141 = vmatprep.subr.bf16.mxu0 0
    %142 = vmatpush1.bf16.xpose.msra.mxu0 0
    %143 = vmatprep.subr.bf16.mxu0 0
    %144 = vmatpush1.bf16.xpose.msra.mxu0 0
    %145 = vmatprep.subr.bf16.mxu0 0
    %146 = vmatpush1.bf16.xpose.msra.mxu0 0
    %147 = vmatprep.subr.bf16.mxu0 0
    %148 = vmatpush1.bf16.xpose.msra.mxu0 0
    %149 = vmatprep.mubr.bf16.mxu0 0
    %150 = vmatmul.mubr.bf16.gmra.mrb[0].mxu0 %v60
    %v151 = vpop.f32.mrb[0].mxu0
    %v152 = vadd.f32 0.0, %v151
    %v153 = vpop.f32.mrb[0].mxu0
    %v154 = vpop.f32.mrb[0].mxu0
    %v155 = vadd.f32 0.0, %v154
    %v156 = vpop.f32.mrb[0].mxu0
    %157 = vdwg.mxu0
    %v158 = vmul.f32 %v152, 20.0
    %v159 = vmul.f32 %v155, 20.0
    %v162 = vunpack.c.l.b16 %v54
    %v163 = vunpack.c.l.b16 %v55
    %v164 = vpack.c.b16 %v163, %v162
    %166 = vmatprep.subr.bf16.mxu0 0
    %167 = vmatpush1.bf16.xpose.msra.mxu0 %v115
    %168 = vmatprep.subr.bf16.mxu0 0
    %169 = vmatpush1.bf16.xpose.msra.mxu0 0
    %170 = vmatprep.subr.bf16.mxu0 0
    %171 = vmatpush1.bf16.xpose.msra.mxu0 0
    %172 = vmatprep.subr.bf16.mxu0 0
    %173 = vmatpush1.bf16.xpose.msra.mxu0 0
    %174 = vmatprep.subr.bf16.mxu0 0
    %175 = vmatpush1.bf16.xpose.msra.mxu0 0
    %176 = vmatprep.subr.bf16.mxu0 0
    %177 = vmatpush1.bf16.xpose.msra.mxu0 0
    %178 = vmatprep.subr.bf16.mxu0 0
    %179 = vmatpush1.bf16.xpose.msra.mxu0 0
    %180 = vmatprep.subr.bf16.mxu0 0
    %181 = vmatpush1.bf16.xpose.msra.mxu0 0
    %182 = vmatprep.subr.bf16.mxu0 0
    %183 = vmatpush1.bf16.xpose.msra.mxu0 0
    %184 = vmatprep.subr.bf16.mxu0 0
    %185 = vmatpush1.bf16.xpose.msra.mxu0 0
    %186 = vmatprep.subr.bf16.mxu0 0
    %187 = vmatpush1.bf16.xpose.msra.mxu0 0
    %188 = vmatprep.subr.bf16.mxu0 0
    %189 = vmatpush1.bf16.xpose.msra.mxu0 0
    %190 = vmatprep.subr.bf16.mxu0 0
    %191 = vmatpush1.bf16.xpose.msra.mxu0 0
    %192 = vmatprep.subr.bf16.mxu0 0
    %193 = vmatpush1.bf16.xpose.msra.mxu0 0
    %194 = vmatprep.subr.bf16.mxu0 0
    %195 = vmatpush1.bf16.xpose.msra.mxu0 0
    %196 = vmatprep.subr.bf16.mxu0 0
    %197 = vmatpush1.bf16.xpose.msra.mxu0 0
    %198 = vmatprep.mubr.bf16.mxu0 0
    %199 = vmatmul.mubr.bf16.gmra.mrb[0].mxu0 %v164
    %v200 = vpop.f32.mrb[0].mxu0
    %v201 = vadd.f32 0.0, %v200
    %v202 = vpop.f32.mrb[0].mxu0
    %v203 = vpop.f32.mrb[0].mxu0
    %v204 = vadd.f32 0.0, %v203
    %v205 = vpop.f32.mrb[0].mxu0
    %206 = vdwg.mxu0
    %v207 = vmul.f32 %v201, 20.0
    %v208 = vmul.f32 %v204, 20.0
    %209 = vmatprep.subr.bf16.mxu0 0
    %210 = vmatpush1.bf16.xpose.msra.mxu0 %v66
    %211 = vmatprep.subr.bf16.mxu0 0
    %212 = vmatpush1.bf16.xpose.msra.mxu0 0
    %213 = vmatprep.subr.bf16.mxu0 0
    %214 = vmatpush1.bf16.xpose.msra.mxu0 0
    %215 = vmatprep.subr.bf16.mxu0 0
    %216 = vmatpush1.bf16.xpose.msra.mxu0 0
    %217 = vmatprep.subr.bf16.mxu0 0
    %218 = vmatpush1.bf16.xpose.msra.mxu0 0
    %219 = vmatprep.subr.bf16.mxu0 0
    %220 = vmatpush1.bf16.xpose.msra.mxu0 0
    %221 = vmatprep.subr.bf16.mxu0 0
    %222 = vmatpush1.bf16.xpose.msra.mxu0 0
    %223 = vmatprep.subr.bf16.mxu0 0
    %224 = vmatpush1.bf16.xpose.msra.mxu0 0
    %225 = vmatprep.subr.bf16.mxu0 0
    %226 = vmatpush1.bf16.xpose.msra.mxu0 0
    %227 = vmatprep.subr.bf16.mxu0 0
    %228 = vmatpush1.bf16.xpose.msra.mxu0 0
    %229 = vmatprep.subr.bf16.mxu0 0
    %230 = vmatpush1.bf16.xpose.msra.mxu0 0
    %231 = vmatprep.subr.bf16.mxu0 0
    %232 = vmatpush1.bf16.xpose.msra.mxu0 0
    %233 = vmatprep.subr.bf16.mxu0 0
    %234 = vmatpush1.bf16.xpose.msra.mxu0 0
    %235 = vmatprep.subr.bf16.mxu0 0
    %236 = vmatpush1.bf16.xpose.msra.mxu0 0
    %237 = vmatprep.subr.bf16.mxu0 0
    %238 = vmatpush1.bf16.xpose.msra.mxu0 0
    %239 = vmatprep.subr.bf16.mxu0 0
    %240 = vmatpush1.bf16.xpose.msra.mxu0 0
    %241 = vmatprep.mubr.bf16.mxu0 0
    %242 = vmatmul.mubr.bf16.gmra.mrb[0].mxu0 %v164
    %v243 = vpop.f32.mrb[0].mxu0
    %v244 = vadd.f32 0.0, %v243
    %v245 = vpop.f32.mrb[0].mxu0
    %v246 = vpop.f32.mrb[0].mxu0
    %v247 = vadd.f32 0.0, %v246
    %v248 = vpop.f32.mrb[0].mxu0
    %249 = vdwg.mxu0
    %v250 = vmul.f32 %v244, 20.0
    %v251 = vmul.f32 %v247, 20.0
    %v252 = vlaneseq
    %v253 = vshrl.u32 %v252, 7
    %v254 = vadd.s32 %v253, 8
    %v255 = vstv %s45
    %v256 = vadd.s32 %v253, %v255
    %v257 = vadd.s32 %v254, %v255
    %v258 = vlaneseq
    %v259 = vand.u32 %v258, 127
    %vm260 = vcmp.eq.s32.totalorder %v256, %v259
    %vm261 = vcmp.eq.s32.totalorder %v257, %v259
    %vm262 = vcmp.ge.s32.totalorder %v259, 8
    %vm263 = vmor %vm260, %vm262
    %vm264 = vmor %vm261, %vm262
    %v265 = vsel %vm263, 1e+09, 0.0
    %v266 = vsel %vm264, 1e+09, 0.0
    %v267 = vsel %vm262, 1e+09, 0.0
    %v268 = vsub.f32 %v109, %v267
    %v269 = vsub.f32 %v110, %v267
    %v270 = vsub.f32 %v207, %v267
    %v271 = vsub.f32 %v208, %v267
    %v272 = vsub.f32 %v158, %v265
    %v273 = vsub.f32 %v159, %v266
    %v274 = vsub.f32 %v250, %v265
    %v275 = vsub.f32 %v251, %v266
    %v276 = vunpack.c.l.bf16 %v50
    %v277 = vunpack.c.l.bf16 %v51
    %v278 = vunpack.c.l.bf16 %v54
    %v279 = vunpack.c.l.bf16 %v55
    %v280 = vmul.f32 %v276, %v278
    %v281 = vmul.f32 %v277, %v279
    %282 = vadd.xlane.f32.xlu0 %v280
    %v283 = vpop.xlane.xlu0 %282
    %284 = vadd.xlane.f32.xlu0 %v281
    %v285 = vpop.xlane.xlu0 %284
    %v286 = vmul.f32 %v283, 20.0
    %v287 = vmul.f32 %v285, 20.0
    %v288 = vsub.f32 %v268, 20.0
    %v289 = vsub.f32 %v269, 20.0
    %v290 = vmul.f32 %v288, 1.442695
    %v291 = vpow.pop %v290
    %v292 = vmul.f32 %v289, 1.442695
    %v293 = vpow.pop %v292
    %vm294 = vcmask 130048
    %v295 = vsel %vm294, %v291, 0.0
    %296 = vadd.xlane.f32.xlu0 %v295
    %v297 = vpop.xlane.xlu0 %296
    %v298 = vsel %vm294, %v293, 0.0
    %299 = vadd.xlane.f32.xlu0 %v298
    %v300 = vpop.xlane.xlu0 %299
    %v301 = vsub.f32 %v272, 20.0
    %v302 = vsub.f32 %v273, 20.0
    %v303 = vmul.f32 %v301, 1.442695
    %v304 = vpow.pop %v303
    %v305 = vmul.f32 %v302, 1.442695
    %v306 = vpow.pop %v305
    %v307 = vsel %vm294, %v304, 0.0
    %308 = vadd.xlane.f32.xlu0 %v307
    %v309 = vpop.xlane.xlu0 %308
    %v310 = vsel %vm294, %v306, 0.0
    %311 = vadd.xlane.f32.xlu0 %v310
    %v312 = vpop.xlane.xlu0 %311
    %v313 = vadd.f32 %v297, %v309
    %v314 = vadd.f32 %v300, %v312
    %v315 = vlog2.pop %v313
    %v316 = vmul.f32 %v315, 0.6931472
    %v317 = vlog2.pop %v314
    %v318 = vmul.f32 %v317, 0.6931472
    %v319 = vadd.f32 %v316, 20.0
    %v320 = vadd.f32 %v318, 20.0
    %v321 = vsub.f32 %v319, %v286
    %v322 = vsub.f32 %v320, %v287
    %v323 = vsub.f32 %v270, 20.0
    %v324 = vsub.f32 %v271, 20.0
    %v325 = vmul.f32 %v323, 1.442695
    %v326 = vpow.pop %v325
    %v327 = vmul.f32 %v324, 1.442695
    %v328 = vpow.pop %v327
    %v329 = vsel %vm294, %v326, 0.0
    %330 = vadd.xlane.f32.xlu0 %v329
    %v331 = vpop.xlane.xlu0 %330
    %v332 = vsel %vm294, %v328, 0.0
    %333 = vadd.xlane.f32.xlu0 %v332
    %v334 = vpop.xlane.xlu0 %333
    %v335 = vsub.f32 %v274, 20.0
    %v336 = vsub.f32 %v275, 20.0
    %v337 = vmul.f32 %v335, 1.442695
    %v338 = vpow.pop %v337
    %v339 = vmul.f32 %v336, 1.442695
    %v340 = vpow.pop %v339
    %v341 = vsel %vm294, %v338, 0.0
    %342 = vadd.xlane.f32.xlu0 %v341
    %v343 = vpop.xlane.xlu0 %342
    %v344 = vsel %vm294, %v340, 0.0
    %345 = vadd.xlane.f32.xlu0 %v344
    %v346 = vpop.xlane.xlu0 %345
    %v347 = vadd.f32 %v331, %v343
    %v348 = vadd.f32 %v334, %v346
    %v349 = vlog2.pop %v347
    %v350 = vmul.f32 %v349, 0.6931472
    %v351 = vlog2.pop %v348
    %v352 = vmul.f32 %v351, 0.6931472
    %v353 = vadd.f32 %v350, 20.0
    %v354 = vadd.f32 %v352, 20.0
    %v355 = vsub.f32 %v353, %v286
    %v356 = vsub.f32 %v354, %v287
    %vm357 = vcmp.lt.s32.totalorder %v256, 8
    %vm358 = vcmp.lt.s32.totalorder %v257, 8
    %v359 = vsel %vm357, 1.0, 0.0
    %v360 = vsel %vm358, 1.0, 0.0
    %v361 = vmul.f32 %v321, %v359
    %v362 = vmul.f32 %v322, %v360
    %v363 = vmul.f32 %v355, %v359
    %v364 = vmul.f32 %v356, %v360
    %vm365 = vcmask 7168
    %v366 = vsel %vm365, %v361, 0.0
    %v367 = vsel %vm365, %v362, 0.0
    %v368 = vadd.f32 %v366, %v367
    %369 = vadd.xlane.f32.xlu0 %v368
    %v370 = vpop.xlane.xlu0 %369
    %v371 = vrot.slane %v370, 4
    %v372 = vadd.f32 %v370, %v371
    %v373 = vrot.slane %v372, 2
    %v374 = vadd.f32 %v372, %v373
    %v375 = vrot.slane %v374, 1
    %v376 = vadd.f32 %v374, %v375
    %s377 = vtos %v376
    %s378 = scalar_lea.smem [#allocation7], 0
    %379 = sst [smem:[%s378]] %s377
    %v380 = vsel %vm365, %v363, 0.0
    %v381 = vsel %vm365, %v364, 0.0
    %v382 = vadd.f32 %v380, %v381
    %383 = vadd.xlane.f32.xlu0 %v382
    %v384 = vpop.xlane.xlu0 %383
    %v385 = vrot.slane %v384, 4
    %v386 = vadd.f32 %v384, %v385
    %v387 = vrot.slane %v386, 2
    %v388 = vadd.f32 %v386, %v387
    %v389 = vrot.slane %v388, 1
    %v390 = vadd.f32 %v388, %v389
    %s391 = vtos %v390
    %s392 = scalar_lea.smem [#allocation7], 1
    %393 = sst [smem:[%s392]] %s391
    // Predicated region
    $region18: #{tpu_custom_call.1} parent=1 // pred_check
      _
    $region19: #{tpu_custom_call.1} parent=1 // pred_check_branch
      %395 = sbr.rel (0) target = $region21
    $region20: #{tpu_custom_call.1} parent=1 // pred_region
      %s397 = ssub.s32 16, 16
      %398 = vsyncadd [#allocation4], %s397
      %401 = dma.smem_to_hbm [#allocation7], 16, %s2, [#allocation4]
    $region21: #{tpu_custom_call.1} parent=1 // pred_fallthru
      _
    // Predicated region
    $region22: #{tpu_custom_call.1} parent=1 // pred_check
      _
    $region23: #{tpu_custom_call.1} parent=1 // pred_check_branch
      %403 = sbr.rel (0) target = $region25
    $region24: #{tpu_custom_call.1} parent=1 // pred_region
      %404 = dma.done [#allocation4], 16
    $region25: #{tpu_custom_call.1} parent=1 // pred_fallthru
      _
    %405 = sfence
    %406 = vsyncpa [#allocation3], 1
    %407 = vsyncpa [#allocation6], 1
    %408 = vsyncpa [#allocation4], 1

</llo_original>
